<compile_context>
chip_gen: v6e
topology: v6e:2x2x1
jax: 0.10.0
libtpu: 0.0.40
codegen_flags: <defaults>
</compile_context>

<pallas_src>
import numpy as np
import jax
import jax.numpy as jnp
from jax.experimental import pallas as pl
from jax.experimental.pallas import tpu as pltpu


def _conv_taps(v, K, padding):
    """v: (C, L) time-last. Returns (K*C, L) where row k*C + c holds v[c, t + padding - k]
    (zero outside [0, L)), i.e. the im2col stack for a stride-1 ConvTranspose1d."""
    C, L = v.shape
    lpad = K - 1 - padding
    rpad = padding
    parts = []
    if lpad > 0:
        parts.append(jnp.zeros((C, lpad), v.dtype))
    parts.append(v)
    if rpad > 0:
        parts.append(jnp.zeros((C, rpad), v.dtype))
    ext = jnp.concatenate(parts, axis=-1) if len(parts) > 1 else v   # (C, L + K - 1)
    return jnp.concatenate([ext[:, K - 1 - k: K - 1 - k + L] for k in range(K)], axis=0)


def _make_kernel(K, padding, L, eps):
    inv_L = 1.0 / L

    def kernel(x_ref, w1_ref, b1_ref, w2_ref, b2_ref, wp_ref, bp_ref, o_ref):
        x = x_ref[0]                                   # (Cin, L), time on lanes

        # ---- conv_transpose1d #1: single fused K-tap matmul ----
        y1 = jnp.dot(w1_ref[...], _conv_taps(x, K, padding),
                     preferred_element_type=jnp.float32) + b1_ref[...]     # (Cout, L)

        # ---- InstanceNorm1d (biased var over time) + ReLU ----
        m1 = jnp.sum(y1, axis=-1, keepdims=True) * inv_L
        c1 = y1 - m1
        v1 = jnp.sum(c1 * c1, axis=-1, keepdims=True) * inv_L
        h = jnp.maximum(c1 * jax.lax.rsqrt(v1 + eps), 0.0)                 # (Cout, L)

        # ---- conv_transpose1d #2 (zero halo comes from _conv_taps) ----
        y2 = jnp.dot(w2_ref[...], _conv_taps(h, K, padding),
                     preferred_element_type=jnp.float32) + b2_ref[...]     # (Cout, L)

        # ---- 1x1 ConvTranspose residual projection ----
        y0 = jnp.dot(wp_ref[...], x, preferred_element_type=jnp.float32) + bp_ref[...]

        # ---- residual add, InstanceNorm1d, output ReLU (out_act=True) ----
        z = y2 + y0
        m2 = jnp.sum(z, axis=-1, keepdims=True) * inv_L
        c2 = z - m2
        v2 = jnp.sum(c2 * c2, axis=-1, keepdims=True) * inv_L
        o_ref[0] = jnp.maximum(c2 * jax.lax.rsqrt(v2 + eps), 0.0).astype(o_ref.dtype)

    return kernel


def resblock_transpose_forward(x_ncl, params, *, kernel_size=3, stride=1, padding=1):
    """Forward pass of ResBlockTranspose (out_act=True). x_ncl: (N, Cin, L) float32.
    params = (w1 (Cin,Cout,K), b1 (Cout,), w2 (Cout,Cout,K), b2 (Cout,),
              wp (Cin,Cout,1) or None, bp (Cout,) or None)."""
    assert stride == 1, "kernel implements the stride=1 (length-preserving) configuration"
    w1, b1, w2, b2, wp, bp = params
    N, Cin, L = x_ncl.shape
    K = kernel_size
    Cout = w1.shape[1]
    L_out = (L - 1) * stride - 2 * padding + K
    assert L_out == L and 2 * padding == K - 1, "residual add requires length-preserving convs"
    eps = 1e-5   # InstanceNorm1d default

    # --- tiny weight repack (negligible; lets each conv be one fused matmul) ---
    # W[co, k*C + ci] = w[ci, co, k]
    W1 = jnp.transpose(w1, (1, 2, 0)).reshape(Cout, K * Cin).astype(jnp.float32)
    W2 = jnp.transpose(w2, (1, 2, 0)).reshape(Cout, K * Cout).astype(jnp.float32)
    if wp is not None:
        Wp = jnp.transpose(wp[:, :, 0], (1, 0)).astype(jnp.float32)       # (Cout, Cin)
        Bp = bp.reshape(Cout, 1).astype(jnp.float32)
    else:
        assert Cin == Cout
        Wp = jnp.eye(Cout, dtype=jnp.float32)                             # identity residual
        Bp = jnp.zeros((Cout, 1), jnp.float32)
    B1 = b1.reshape(Cout, 1).astype(jnp.float32)
    B2 = b2.reshape(Cout, 1).astype(jnp.float32)

    kernel = _make_kernel(K, padding, L, eps)

    grid = (N,)
    in_specs = [
        pl.BlockSpec((1, Cin, L), lambda n: (n, 0, 0)),          # activations: one batch / step
        pl.BlockSpec((Cout, K * Cin), lambda n: (0, 0)),         # weights: constant index_map,
        pl.BlockSpec((Cout, 1), lambda n: (0, 0)),               #   stay resident across steps
        pl.BlockSpec((Cout, K * Cout), lambda n: (0, 0)),
        pl.BlockSpec((Cout, 1), lambda n: (0, 0)),
        pl.BlockSpec((Cout, Cin), lambda n: (0, 0)),
        pl.BlockSpec((Cout, 1), lambda n: (0, 0)),
    ]
    out_specs = pl.BlockSpec((1, Cout, L), lambda n: (n, 0, 0))

    return pl.pallas_call(
        kernel,
        out_shape=jax.ShapeDtypeStruct((N, Cout, L), jnp.float32),
        grid=grid,
        in_specs=in_specs,
        out_specs=out_specs,
        compiler_params=pltpu.CompilerParams(dimension_semantics=("parallel",)),
    )(x_ncl.astype(jnp.float32), W1, B1, W2, B2, Wp, Bp)


# ---------------------- pure numpy reference (PyTorch semantics) ----------------------
def _ref_conv_transpose1d(x, w, b, padding):
    # x: (N, Cin, L), w: (Cin, Cout, K), stride=1, output_padding=0, dilation=1
    N, Cin, L = x.shape
    _, Cout, K = w.shape
    Lout = (L - 1) - 2 * padding + K
    y = np.zeros((N, Cout, Lout), dtype=np.float64)
    for n in range(N):
        for co in range(Cout):
            for t in range(Lout):
                acc = float(b[co])
                for ci in range(Cin):
                    for k in range(K):
                        s = t + padding - k
                        if 0 <= s < L:
                            acc += float(x[n, ci, s]) * float(w[ci, co, k])
                y[n, co, t] = acc
    return y


def _ref_instance_norm(y, eps=1e-5):
    m = y.mean(axis=2, keepdims=True)
    v = y.var(axis=2, keepdims=True)     # biased variance, like InstanceNorm1d
    return (y - m) / np.sqrt(v + eps)


def _ref_forward(x, w1, b1, w2, b2, wp, bp):
    y = np.maximum(_ref_instance_norm(_ref_conv_transpose1d(x, w1, b1, 1)), 0.0)
    y = _ref_conv_transpose1d(y, w2, b2, 1)
    y0 = _ref_conv_transpose1d(x, wp, bp, 0)   # project_features (Cin != Cout)
    y = _ref_instance_norm(y + y0)
    return np.maximum(y, 0.0)                  # out_act=True


if __name__ == "__main__":
    # ResBlockTranspose(in_channels=4, out_channels=8, kernel_size=3, stride=1, padding=1)
    N, Cin, Cout, L, K = 2, 4, 8, 16, 3
    key = jax.random.PRNGKey(0)
    ks = jax.random.split(key, 7)
    x = jax.random.normal(ks[0], (N, Cin, L), jnp.float32)
    w1 = 0.3 * jax.random.normal(ks[1], (Cin, Cout, K), jnp.float32)   # conv1.weight
    b1 = 0.1 * jax.random.normal(ks[2], (Cout,), jnp.float32)          # conv1.bias
    w2 = 0.3 * jax.random.normal(ks[3], (Cout, Cout, K), jnp.float32)  # conv2.weight
    b2 = 0.1 * jax.random.normal(ks[4], (Cout,), jnp.float32)          # conv2.bias
    wp = 0.3 * jax.random.normal(ks[5], (Cin, Cout, 1), jnp.float32)   # proj.weight
    bp = 0.1 * jax.random.normal(ks[6], (Cout,), jnp.float32)          # proj.bias

    out = resblock_transpose_forward(x, (w1, b1, w2, b2, wp, bp),
                                     kernel_size=K, stride=1, padding=1)
    out = jax.block_until_ready(out)
    assert out.shape == (N, Cout, L)

    ref = _ref_forward(np.asarray(x, np.float64), np.asarray(w1, np.float64),
                       np.asarray(b1, np.float64), np.asarray(w2, np.float64),
                       np.asarray(b2, np.float64), np.asarray(wp, np.float64),
                       np.asarray(bp, np.float64))
    np.testing.assert_allclose(np.asarray(out, np.float64), ref, rtol=5e-3, atol=5e-3)
    print("KERNEL_OK")
</pallas_src>

<mosaic_0001>
module attributes {stable_mosaic.version = 11 : i64} {
  func.func @kernel(%arg0: i32, %arg1: memref<1x4x16xf32, #tpu.memory_space<vmem>>, %arg2: memref<8x12xf32, #tpu.memory_space<vmem>>, %arg3: memref<8x1xf32, #tpu.memory_space<vmem>>, %arg4: memref<8x24xf32, #tpu.memory_space<vmem>>, %arg5: memref<8x1xf32, #tpu.memory_space<vmem>>, %arg6: memref<8x4xf32, #tpu.memory_space<vmem>>, %arg7: memref<8x1xf32, #tpu.memory_space<vmem>>, %arg8: memref<1x8x16xf32, #tpu.memory_space<vmem>>) attributes {dimension_semantics = [#tpu.dimension_semantics<parallel>], iteration_bounds = array<i64: 2>, scalar_prefetch = 0 : i64, scratch_operands = 0 : i64, tpu.core_type = #tpu.core_type<tc>, window_params = [{transform_indices = @transform_0, window_bounds = array<i64: 1, 4, 16>}, {pipeline_mode = #tpu.pipeline_mode<synchronous>, transform_indices = @transform_1, window_bounds = array<i64: 8, 12>}, {pipeline_mode = #tpu.pipeline_mode<synchronous>, transform_indices = @transform_2, window_bounds = array<i64: 8, 1>}, {pipeline_mode = #tpu.pipeline_mode<synchronous>, transform_indices = @transform_3, window_bounds = array<i64: 8, 24>}, {pipeline_mode = #tpu.pipeline_mode<synchronous>, transform_indices = @transform_4, window_bounds = array<i64: 8, 1>}, {pipeline_mode = #tpu.pipeline_mode<synchronous>, transform_indices = @transform_5, window_bounds = array<i64: 8, 4>}, {pipeline_mode = #tpu.pipeline_mode<synchronous>, transform_indices = @transform_6, window_bounds = array<i64: 8, 1>}, {transform_indices = @transform_7, window_bounds = array<i64: 1, 8, 16>}]} {
    %c0 = arith.constant 0 : index
    %c0_0 = arith.constant 0 : index
    %c0_1 = arith.constant 0 : index
    %0 = vector.load %arg1[%c0, %c0_0, %c0_1] : memref<1x4x16xf32, #tpu.memory_space<vmem>>, vector<1x4x16xf32>
    %1 = vector.shape_cast %0 : vector<1x4x16xf32> to vector<4x16xf32>
    %c0_2 = arith.constant 0 : index
    %c0_3 = arith.constant 0 : index
    %2 = vector.load %arg2[%c0_2, %c0_3] : memref<8x12xf32, #tpu.memory_space<vmem>>, vector<8x12xf32>
    %cst = arith.constant 0.000000e+00 : f32
    %3 = vector.broadcast %cst : f32 to vector<4x1xf32>
    %cst_4 = arith.constant 0.000000e+00 : f32
    %4 = vector.broadcast %cst_4 : f32 to vector<4x1xf32>
    %5 = tpu.concatenate %3, %1, %4 in 1 : vector<4x1xf32>, vector<4x16xf32>, vector<4x1xf32> -> vector<4x18xf32>
    %6 = vector.extract_strided_slice %5 {offsets = [0, 2], sizes = [4, 16], strides = [1, 1]} : vector<4x18xf32> to vector<4x16xf32>
    %7 = vector.extract_strided_slice %5 {offsets = [0, 1], sizes = [4, 16], strides = [1, 1]} : vector<4x18xf32> to vector<4x16xf32>
    %8 = vector.extract_strided_slice %5 {offsets = [0, 0], sizes = [4, 16], strides = [1, 1]} : vector<4x18xf32> to vector<4x16xf32>
    %9 = tpu.concatenate %6, %7, %8 in 0 : vector<4x16xf32>, vector<4x16xf32>, vector<4x16xf32> -> vector<12x16xf32>
    %cst_5 = arith.constant dense<0.000000e+00> : vector<8x16xf32>
    %10 = tpu.matmul %2, %9, %cst_5 {dimension_numbers = #tpu.dot_dimension_numbers<[1], [0], [0], [1], [0, 0, 1, 1], [], []>} : vector<8x12xf32>, vector<12x16xf32>, vector<8x16xf32> -> vector<8x16xf32>
    %c0_6 = arith.constant 0 : index
    %c0_7 = arith.constant 0 : index
    %11 = vector.load %arg3[%c0_6, %c0_7] : memref<8x1xf32, #tpu.memory_space<vmem>>, vector<8x1xf32>
    %12 = vector.broadcast %11 : vector<8x1xf32> to vector<8x16xf32>
    %13 = arith.addf %10, %12 : vector<8x16xf32>
    %cst_8 = arith.constant dense<0.000000e+00> : vector<8xf32>
    %14 = vector.multi_reduction <add>, %13, %cst_8 [1] : vector<8x16xf32> to vector<8xf32>
    %15 = vector.shape_cast %14 : vector<8xf32> to vector<8x1xf32>
    %cst_9 = arith.constant 6.250000e-02 : f32
    %16 = vector.broadcast %cst_9 : f32 to vector<8x1xf32>
    %17 = arith.mulf %15, %16 : vector<8x1xf32>
    %18 = vector.broadcast %17 : vector<8x1xf32> to vector<8x16xf32>
    %19 = arith.subf %13, %18 : vector<8x16xf32>
    %20 = arith.mulf %19, %19 : vector<8x16xf32>
    %cst_10 = arith.constant dense<0.000000e+00> : vector<8xf32>
    %21 = vector.multi_reduction <add>, %20, %cst_10 [1] : vector<8x16xf32> to vector<8xf32>
    %22 = vector.shape_cast %21 : vector<8xf32> to vector<8x1xf32>
    %cst_11 = arith.constant 6.250000e-02 : f32
    %23 = vector.broadcast %cst_11 : f32 to vector<8x1xf32>
    %24 = arith.mulf %22, %23 : vector<8x1xf32>
    %cst_12 = arith.constant 9.99999974E-6 : f32
    %25 = vector.broadcast %cst_12 : f32 to vector<8x1xf32>
    %26 = arith.addf %24, %25 : vector<8x1xf32>
    %27 = math.rsqrt %26 : vector<8x1xf32>
    %28 = vector.broadcast %27 : vector<8x1xf32> to vector<8x16xf32>
    %29 = arith.mulf %19, %28 : vector<8x16xf32>
    %cst_13 = arith.constant 0.000000e+00 : f32
    %30 = vector.broadcast %cst_13 : f32 to vector<8x16xf32>
    %31 = arith.maximumf %29, %30 : vector<8x16xf32>
    %c0_14 = arith.constant 0 : index
    %c0_15 = arith.constant 0 : index
    %32 = vector.load %arg4[%c0_14, %c0_15] : memref<8x24xf32, #tpu.memory_space<vmem>>, vector<8x24xf32>
    %cst_16 = arith.constant 0.000000e+00 : f32
    %33 = vector.broadcast %cst_16 : f32 to vector<8x1xf32>
    %cst_17 = arith.constant 0.000000e+00 : f32
    %34 = vector.broadcast %cst_17 : f32 to vector<8x1xf32>
    %35 = tpu.concatenate %33, %31, %34 in 1 : vector<8x1xf32>, vector<8x16xf32>, vector<8x1xf32> -> vector<8x18xf32>
    %36 = vector.extract_strided_slice %35 {offsets = [0, 2], sizes = [8, 16], strides = [1, 1]} : vector<8x18xf32> to vector<8x16xf32>
    %37 = vector.extract_strided_slice %35 {offsets = [0, 1], sizes = [8, 16], strides = [1, 1]} : vector<8x18xf32> to vector<8x16xf32>
    %38 = vector.extract_strided_slice %35 {offsets = [0, 0], sizes = [8, 16], strides = [1, 1]} : vector<8x18xf32> to vector<8x16xf32>
    %39 = tpu.concatenate %36, %37, %38 in 0 : vector<8x16xf32>, vector<8x16xf32>, vector<8x16xf32> -> vector<24x16xf32>
    %cst_18 = arith.constant dense<0.000000e+00> : vector<8x16xf32>
    %40 = tpu.matmul %32, %39, %cst_18 {dimension_numbers = #tpu.dot_dimension_numbers<[1], [0], [0], [1], [0, 0, 1, 1], [], []>} : vector<8x24xf32>, vector<24x16xf32>, vector<8x16xf32> -> vector<8x16xf32>
    %c0_19 = arith.constant 0 : index
    %c0_20 = arith.constant 0 : index
    %41 = vector.load %arg5[%c0_19, %c0_20] : memref<8x1xf32, #tpu.memory_space<vmem>>, vector<8x1xf32>
    %42 = vector.broadcast %41 : vector<8x1xf32> to vector<8x16xf32>
    %43 = arith.addf %40, %42 : vector<8x16xf32>
    %c0_21 = arith.constant 0 : index
    %c0_22 = arith.constant 0 : index
    %44 = vector.load %arg6[%c0_21, %c0_22] : memref<8x4xf32, #tpu.memory_space<vmem>>, vector<8x4xf32>
    %cst_23 = arith.constant dense<0.000000e+00> : vector<8x16xf32>
    %45 = tpu.matmul %44, %1, %cst_23 {dimension_numbers = #tpu.dot_dimension_numbers<[1], [0], [0], [1], [0, 0, 1, 1], [], []>} : vector<8x4xf32>, vector<4x16xf32>, vector<8x16xf32> -> vector<8x16xf32>
    %c0_24 = arith.constant 0 : index
    %c0_25 = arith.constant 0 : index
    %46 = vector.load %arg7[%c0_24, %c0_25] : memref<8x1xf32, #tpu.memory_space<vmem>>, vector<8x1xf32>
    %47 = vector.broadcast %46 : vector<8x1xf32> to vector<8x16xf32>
    %48 = arith.addf %45, %47 : vector<8x16xf32>
    %49 = arith.addf %43, %48 : vector<8x16xf32>
    %cst_26 = arith.constant dense<0.000000e+00> : vector<8xf32>
    %50 = vector.multi_reduction <add>, %49, %cst_26 [1] : vector<8x16xf32> to vector<8xf32>
    %51 = vector.shape_cast %50 : vector<8xf32> to vector<8x1xf32>
    %cst_27 = arith.constant 6.250000e-02 : f32
    %52 = vector.broadcast %cst_27 : f32 to vector<8x1xf32>
    %53 = arith.mulf %51, %52 : vector<8x1xf32>
    %54 = vector.broadcast %53 : vector<8x1xf32> to vector<8x16xf32>
    %55 = arith.subf %49, %54 : vector<8x16xf32>
    %56 = arith.mulf %55, %55 : vector<8x16xf32>
    %cst_28 = arith.constant dense<0.000000e+00> : vector<8xf32>
    %57 = vector.multi_reduction <add>, %56, %cst_28 [1] : vector<8x16xf32> to vector<8xf32>
    %58 = vector.shape_cast %57 : vector<8xf32> to vector<8x1xf32>
    %cst_29 = arith.constant 6.250000e-02 : f32
    %59 = vector.broadcast %cst_29 : f32 to vector<8x1xf32>
    %60 = arith.mulf %58, %59 : vector<8x1xf32>
    %cst_30 = arith.constant 9.99999974E-6 : f32
    %61 = vector.broadcast %cst_30 : f32 to vector<8x1xf32>
    %62 = arith.addf %60, %61 : vector<8x1xf32>
    %63 = math.rsqrt %62 : vector<8x1xf32>
    %64 = vector.broadcast %63 : vector<8x1xf32> to vector<8x16xf32>
    %65 = arith.mulf %55, %64 : vector<8x16xf32>
    %cst_31 = arith.constant 0.000000e+00 : f32
    %66 = vector.broadcast %cst_31 : f32 to vector<8x16xf32>
    %67 = arith.maximumf %65, %66 : vector<8x16xf32>
    %c0_32 = arith.constant 0 : index
    %c0_33 = arith.constant 0 : index
    %c0_34 = arith.constant 0 : index
    %68 = vector.load %arg8[%c0_32, %c0_33, %c0_34] : memref<1x8x16xf32, #tpu.memory_space<vmem>>, vector<1x8x16xf32>
    %69 = vector.shape_cast %68 : vector<1x8x16xf32> to vector<8x16xf32>
    %70 = vector.shape_cast %67 : vector<8x16xf32> to vector<1x8x16xf32>
    tpu.vector_store %arg8[%c0_32, %c0_33, %c0_34], %70 {strides = array<i32>} : memref<1x8x16xf32, #tpu.memory_space<vmem>>, vector<1x8x16xf32>,
    return
  }
  func.func @transform_0(%arg0: i32) -> (i32, i32, i32) {
    %c0_i32 = arith.constant 0 : i32
    %c0_i32_0 = arith.constant 0 : i32
    %c0_i32_1 = arith.constant 0 : i32
    return %arg0, %c0_i32, %c0_i32_0 : i32, i32, i32
  }
  func.func @transform_1(%arg0: i32) -> (i32, i32) {
    %c0_i32 = arith.constant 0 : i32
    %c0_i32_0 = arith.constant 0 : i32
    %c0_i32_1 = arith.constant 0 : i32
    return %c0_i32, %c0_i32_0 : i32, i32
  }
  func.func @transform_2(%arg0: i32) -> (i32, i32) {
    %c0_i32 = arith.constant 0 : i32
    %c0_i32_0 = arith.constant 0 : i32
    %c0_i32_1 = arith.constant 0 : i32
    return %c0_i32, %c0_i32_0 : i32, i32
  }
  func.func @transform_3(%arg0: i32) -> (i32, i32) {
    %c0_i32 = arith.constant 0 : i32
    %c0_i32_0 = arith.constant 0 : i32
    %c0_i32_1 = arith.constant 0 : i32
    return %c0_i32, %c0_i32_0 : i32, i32
  }
  func.func @transform_4(%arg0: i32) -> (i32, i32) {
    %c0_i32 = arith.constant 0 : i32
    %c0_i32_0 = arith.constant 0 : i32
    %c0_i32_1 = arith.constant 0 : i32
    return %c0_i32, %c0_i32_0 : i32, i32
  }
  func.func @transform_5(%arg0: i32) -> (i32, i32) {
    %c0_i32 = arith.constant 0 : i32
    %c0_i32_0 = arith.constant 0 : i32
    %c0_i32_1 = arith.constant 0 : i32
    return %c0_i32, %c0_i32_0 : i32, i32
  }
  func.func @transform_6(%arg0: i32) -> (i32, i32) {
    %c0_i32 = arith.constant 0 : i32
    %c0_i32_0 = arith.constant 0 : i32
    %c0_i32_1 = arith.constant 0 : i32
    return %c0_i32, %c0_i32_0 : i32, i32
  }
  func.func @transform_7(%arg0: i32) -> (i32, i32, i32) {
    %c0_i32 = arith.constant 0 : i32
    %c0_i32_0 = arith.constant 0 : i32
    %c0_i32_1 = arith.constant 0 : i32
    return %arg0, %c0_i32, %c0_i32_0 : i32, i32, i32
  }
}

</mosaic_0001>

<llo_original>
// kernel: tpu_custom_call.1
$region0: #{tpu_custom_call.1}
  #allocation0 [shape = 'u32[]', space=smem, size = 0x4, offset = 0x4, fixed_abs, tag = 'smem constant byte address 0x4 - core index']
  #allocation1 [shape = 'u32[144,128]{1,0:T(1,128)}', space=vmem, size = 0x12000, scoped, tag = 'internal scratch']
  %s0 = inlined_call_operand.vmem [shape: f32[2,4,16], index: 0, kind: input, shape index: {}]
  %s1 = inlined_call_operand.vmem [shape: f32[8,12], index: 1, kind: input, shape index: {}]
  %s2 = inlined_call_operand.vmem [shape: f32[8,1], index: 2, kind: input, shape index: {}]
  %s3 = inlined_call_operand.vmem [shape: f32[8,24], index: 3, kind: input, shape index: {}]
  %s4 = inlined_call_operand.vmem [shape: f32[8,1], index: 4, kind: input, shape index: {}]
  %s5 = inlined_call_operand.vmem [shape: f32[8,4], index: 5, kind: input, shape index: {}]
  %s6 = inlined_call_operand.vmem [shape: f32[8,1], index: 6, kind: input, shape index: {}]
  %s7 = inlined_call_operand.hbm [shape: f32[2,8,16], index: 7, kind: output, shape index: {}]
  %s8 = sld [smem:[#allocation0]]
  $region61: #{tpu_custom_call.1} parent=0
    _
  %s10 = ssub.s32 1, %s8
  %s11 = scalar_select 0, %s10, %s8
  $region1: #{tpu_custom_call.1} parent=0
    #allocation2 [shape = 'u8[8192]{0}', space=vmem, size = 0x2000, scoped, tag = 'output window, operand 0']
    #allocation3 [shape = 's32[2]{0}', space=sflag, size = 0x8, scoped, tag = 'scoped memory for tpu_custom_call.1']
    %12 = vsyncpa [#allocation3], 0
    %s13 = scalar_lea.sflag [#allocation3], 1
    %14 = vsyncpa %s13, 0
    loop: start=0, step=1, limit=4
    $region2: #{tpu_custom_call.1} parent=1 // loop_pre_header
      _
    $region3: #{tpu_custom_call.1} parent=1 // loop_header
      %s16 = sphi 0, %s20
      %p17 = scmp.ge.s32.totalorder %s16, 4
      %s26 = sphi 0, %s28
      %s29 = sphi 0, %s26
      %s30 = sphi 0, %s29
      %s46 = sphi 0, %s30
      %s50 = sphi 0, %s50
      %s52 = sphi 0, %s50
      %s53 = sphi 0, %s52
      %s67 = sphi 0, %s53
      %s71 = sphi 0, %s71
      %s73 = sphi 0, %s71
      %s74 = sphi 0, %s73
      %s88 = sphi 0, %s74
      %s92 = sphi 0, %s92
      %s94 = sphi 0, %s92
      %s95 = sphi 0, %s94
      %s109 = sphi 0, %s95
      %s113 = sphi 0, %s113
      %s115 = sphi 0, %s113
      %s116 = sphi 0, %s115
      %s130 = sphi 0, %s116
      %s134 = sphi 0, %s134
      %s136 = sphi 0, %s134
      %s137 = sphi 0, %s136
      %s151 = sphi 0, %s137
      %s155 = sphi 0, %s155
      %s157 = sphi 0, %s155
      %s158 = sphi 0, %s157
      %s172 = sphi 0, %s158
      %s178 = sphi 0, %s180
      %s181 = sphi 0, %s178
      %s182 = sphi 0, %s181
      %s198 = sphi 0, %s182
    $region4: #{tpu_custom_call.1} parent=1 // loop_header_branch
      %19 = sbr.rel (%p17) target = $region8
    $region5: #{tpu_custom_call.1} parent=1 // loop_body
      %s21 = ssub.s32 %s16, 1
      %s22 = ssub.s32 %s16, 2
      %s23 = sadd.s32 %s16, 1
      %s24 = ssub.s32 %s16, %s23
      %p25 = scmp.eq.s32.totalorder %s24, 0
      %s27 = sadd.s32 %s26, 1
      %s28 = scalar_select %p25, %s26, %s27
      %p31 = pneg %p25
      %p32 = scmp.eq.s32.totalorder %s16, 1
      %p33 = por %p31, %p32
      %p34 = scmp.ne.s32.totalorder %s26, %s29
      %p35 = scmp.eq.s32.totalorder %s16, 0
      %p36 = por %p34, %p35
      %p37 = scmp.ne.s32.totalorder %s26, %s29
      %p38 = scmp.eq.s32.totalorder %s21, 1
      %p39 = por %p37, %p38
      %p40 = scmp.ne.s32.totalorder %s29, %s30
      %p41 = scmp.eq.s32.totalorder %s21, 0
      %p42 = por %p40, %p41
      %p43 = scmp.ne.s32.totalorder %s29, %s30
      %p44 = scmp.eq.s32.totalorder %s22, 1
      %p45 = por %p43, %p44
      %p47 = scmp.ne.s32.totalorder %s30, %s46
      %p48 = scmp.eq.s32.totalorder %s22, 0
      %p49 = por %p47, %p48
      %s51 = sadd.s32 %s50, 1
      %p54 = scmp.eq.s32.totalorder %s16, 1
      %p55 = scmp.ne.s32.totalorder %s50, %s52
      %p56 = scmp.eq.s32.totalorder %s16, 0
      %p57 = por %p55, %p56
      %p58 = scmp.ne.s32.totalorder %s50, %s52
      %p59 = scmp.eq.s32.totalorder %s21, 1
      %p60 = por %p58, %p59
      %p61 = scmp.ne.s32.totalorder %s52, %s53
      %p62 = scmp.eq.s32.totalorder %s21, 0
      %p63 = por %p61, %p62
      %p64 = scmp.ne.s32.totalorder %s52, %s53
      %p65 = scmp.eq.s32.totalorder %s22, 1
      %p66 = por %p64, %p65
      %p68 = scmp.ne.s32.totalorder %s53, %s67
      %p69 = scmp.eq.s32.totalorder %s22, 0
      %p70 = por %p68, %p69
      %s72 = sadd.s32 %s71, 1
      %p75 = scmp.eq.s32.totalorder %s16, 1
      %p76 = scmp.ne.s32.totalorder %s71, %s73
      %p77 = scmp.eq.s32.totalorder %s16, 0
      %p78 = por %p76, %p77
      %p79 = scmp.ne.s32.totalorder %s71, %s73
      %p80 = scmp.eq.s32.totalorder %s21, 1
      %p81 = por %p79, %p80
      %p82 = scmp.ne.s32.totalorder %s73, %s74
      %p83 = scmp.eq.s32.totalorder %s21, 0
      %p84 = por %p82, %p83
      %p85 = scmp.ne.s32.totalorder %s73, %s74
      %p86 = scmp.eq.s32.totalorder %s22, 1
      %p87 = por %p85, %p86
      %p89 = scmp.ne.s32.totalorder %s74, %s88
      %p90 = scmp.eq.s32.totalorder %s22, 0
      %p91 = por %p89, %p90
      %s93 = sadd.s32 %s92, 1
      %p96 = scmp.eq.s32.totalorder %s16, 1
      %p97 = scmp.ne.s32.totalorder %s92, %s94
      %p98 = scmp.eq.s32.totalorder %s16, 0
      %p99 = por %p97, %p98
      %p100 = scmp.ne.s32.totalorder %s92, %s94
      %p101 = scmp.eq.s32.totalorder %s21, 1
      %p102 = por %p100, %p101
      %p103 = scmp.ne.s32.totalorder %s94, %s95
      %p104 = scmp.eq.s32.totalorder %s21, 0
      %p105 = por %p103, %p104
      %p106 = scmp.ne.s32.totalorder %s94, %s95
      %p107 = scmp.eq.s32.totalorder %s22, 1
      %p108 = por %p106, %p107
      %p110 = scmp.ne.s32.totalorder %s95, %s109
      %p111 = scmp.eq.s32.totalorder %s22, 0
      %p112 = por %p110, %p111
      %s114 = sadd.s32 %s113, 1
      %p117 = scmp.eq.s32.totalorder %s16, 1
      %p118 = scmp.ne.s32.totalorder %s113, %s115
      %p119 = scmp.eq.s32.totalorder %s16, 0
      %p120 = por %p118, %p119
      %p121 = scmp.ne.s32.totalorder %s113, %s115
      %p122 = scmp.eq.s32.totalorder %s21, 1
      %p123 = por %p121, %p122
      %p124 = scmp.ne.s32.totalorder %s115, %s116
      %p125 = scmp.eq.s32.totalorder %s21, 0
      %p126 = por %p124, %p125
      %p127 = scmp.ne.s32.totalorder %s115, %s116
      %p128 = scmp.eq.s32.totalorder %s22, 1
      %p129 = por %p127, %p128
      %p131 = scmp.ne.s32.totalorder %s116, %s130
      %p132 = scmp.eq.s32.totalorder %s22, 0
      %p133 = por %p131, %p132
      %s135 = sadd.s32 %s134, 1
      %p138 = scmp.eq.s32.totalorder %s16, 1
      %p139 = scmp.ne.s32.totalorder %s134, %s136
      %p140 = scmp.eq.s32.totalorder %s16, 0
      %p141 = por %p139, %p140
      %p142 = scmp.ne.s32.totalorder %s134, %s136
      %p143 = scmp.eq.s32.totalorder %s21, 1
      %p144 = por %p142, %p143
      %p145 = scmp.ne.s32.totalorder %s136, %s137
      %p146 = scmp.eq.s32.totalorder %s21, 0
      %p147 = por %p145, %p146
      %p148 = scmp.ne.s32.totalorder %s136, %s137
      %p149 = scmp.eq.s32.totalorder %s22, 1
      %p150 = por %p148, %p149
      %p152 = scmp.ne.s32.totalorder %s137, %s151
      %p153 = scmp.eq.s32.totalorder %s22, 0
      %p154 = por %p152, %p153
      %s156 = sadd.s32 %s155, 1
      %p159 = scmp.eq.s32.totalorder %s16, 1
      %p160 = scmp.ne.s32.totalorder %s155, %s157
      %p161 = scmp.eq.s32.totalorder %s16, 0
      %p162 = por %p160, %p161
      %p163 = scmp.ne.s32.totalorder %s155, %s157
      %p164 = scmp.eq.s32.totalorder %s21, 1
      %p165 = por %p163, %p164
      %p166 = scmp.ne.s32.totalorder %s157, %s158
      %p167 = scmp.eq.s32.totalorder %s21, 0
      %p168 = por %p166, %p167
      %p169 = scmp.ne.s32.totalorder %s157, %s158
      %p170 = scmp.eq.s32.totalorder %s22, 1
      %p171 = por %p169, %p170
      %p173 = scmp.ne.s32.totalorder %s158, %s172
      %p174 = scmp.eq.s32.totalorder %s22, 0
      %p175 = por %p173, %p174
      %s176 = ssub.s32 %s16, %s23
      %p177 = scmp.eq.s32.totalorder %s176, 0
      %s179 = sadd.s32 %s178, 1
      %s180 = scalar_select %p177, %s178, %s179
      %p183 = pneg %p177
      %p184 = scmp.eq.s32.totalorder %s16, 1
      %p185 = por %p183, %p184
      %p186 = scmp.ne.s32.totalorder %s178, %s181
      %p187 = scmp.eq.s32.totalorder %s16, 0
      %p188 = por %p186, %p187
      %p189 = scmp.ne.s32.totalorder %s178, %s181
      %p190 = scmp.eq.s32.totalorder %s21, 1
      %p191 = por %p189, %p190
      %p192 = scmp.ne.s32.totalorder %s181, %s182
      %p193 = scmp.eq.s32.totalorder %s21, 0
      %p194 = por %p192, %p193
      %p195 = scmp.ne.s32.totalorder %s181, %s182
      %p196 = scmp.eq.s32.totalorder %s22, 1
      %p197 = por %p195, %p196
      %p199 = scmp.ne.s32.totalorder %s182, %s198
      %p200 = scmp.eq.s32.totalorder %s22, 0
      %p201 = por %p199, %p200
      %p202 = scmp.le.s32.totalorder 1, %s16
      %p203 = scmp.lt.s32.totalorder %s16, 3
      %p204 = pnand %p202, %p203
      %p205 = pneg %p204
      // Predicated region
      $region9: #{tpu_custom_call.1} parent=5 // pred_check
        _
      $region10: #{tpu_custom_call.1} parent=5 // pred_check_branch
        %207 = sbr.rel (%p204) target = $region12
      $region11: #{tpu_custom_call.1} parent=5 // pred_region
        %s208 = ssub.s32 %s16, 1
        // Predicated region
        $region13: #{tpu_custom_call.1} parent=11 // pred_check
          %p209 = pneg %p63
        $region14: #{tpu_custom_call.1} parent=11 // pred_check_branch
          %211 = sbr.rel (%p209) target = $region16
        $region15: #{tpu_custom_call.1} parent=11 // pred_region
          _
        $region16: #{tpu_custom_call.1} parent=11 // pred_fallthru
          _
        // Predicated region
        $region17: #{tpu_custom_call.1} parent=11 // pred_check
          %p212 = pneg %p84
        $region18: #{tpu_custom_call.1} parent=11 // pred_check_branch
          %214 = sbr.rel (%p212) target = $region20
        $region19: #{tpu_custom_call.1} parent=11 // pred_region
          _
        $region20: #{tpu_custom_call.1} parent=11 // pred_fallthru
          _
        // Predicated region
        $region21: #{tpu_custom_call.1} parent=11 // pred_check
          %p215 = pneg %p105
        $region22: #{tpu_custom_call.1} parent=11 // pred_check_branch
          %217 = sbr.rel (%p215) target = $region24
        $region23: #{tpu_custom_call.1} parent=11 // pred_region
          _
        $region24: #{tpu_custom_call.1} parent=11 // pred_fallthru
          _
        // Predicated region
        $region25: #{tpu_custom_call.1} parent=11 // pred_check
          %p218 = pneg %p126
        $region26: #{tpu_custom_call.1} parent=11 // pred_check_branch
          %220 = sbr.rel (%p218) target = $region28
        $region27: #{tpu_custom_call.1} parent=11 // pred_region
          _
        $region28: #{tpu_custom_call.1} parent=11 // pred_fallthru
          _
        // Predicated region
        $region29: #{tpu_custom_call.1} parent=11 // pred_check
          %p221 = pneg %p147
        $region30: #{tpu_custom_call.1} parent=11 // pred_check_branch
          %223 = sbr.rel (%p221) target = $region32
        $region31: #{tpu_custom_call.1} parent=11 // pred_region
          _
        $region32: #{tpu_custom_call.1} parent=11 // pred_fallthru
          _
        // Predicated region
        $region33: #{tpu_custom_call.1} parent=11 // pred_check
          %p224 = pneg %p168
        $region34: #{tpu_custom_call.1} parent=11 // pred_check_branch
          %226 = sbr.rel (%p224) target = $region36
        $region35: #{tpu_custom_call.1} parent=11 // pred_region
          _
        $region36: #{tpu_custom_call.1} parent=11 // pred_fallthru
          _
      $region12: #{tpu_custom_call.1} parent=5 // pred_fallthru
        _
      %p227 = scmp.lt.s32.totalorder %s16, 2
      // Predicated region
      $region37: #{tpu_custom_call.1} parent=5 // pred_check
        %p228 = pneg %p227
      $region38: #{tpu_custom_call.1} parent=5 // pred_check_branch
        %230 = sbr.rel (%p228) target = $region40
      $region39: #{tpu_custom_call.1} parent=5 // pred_region
        // Predicated region
        $region41: #{tpu_custom_call.1} parent=39 // pred_check
          %p231 = pneg %p36
        $region42: #{tpu_custom_call.1} parent=39 // pred_check_branch
          %233 = sbr.rel (%p231) target = $region44
        $region43: #{tpu_custom_call.1} parent=39 // pred_region
          %p234 = scmp.lt.s32.totalorder %s16, 1
          %s235 = scalar_select %p234, %s16, 1
          %s236 = smul.addr %s235, 4
          %s237 = scalar_lea.vmem %s0, %s236
        $region44: #{tpu_custom_call.1} parent=39 // pred_fallthru
          _
      $region40: #{tpu_custom_call.1} parent=5 // pred_fallthru
        _
      %p238 = scmp.le.s32.totalorder 1, %s16
      %p239 = scmp.lt.s32.totalorder %s16, 3
      %p240 = pnand %p238, %p239
      %p241 = pneg %p240
      // Predicated region
      $region45: #{tpu_custom_call.1} parent=5 // pred_check
        _
      $region46: #{tpu_custom_call.1} parent=5 // pred_check_branch
        %243 = sbr.rel (%p240) target = $region48
      $region47: #{tpu_custom_call.1} parent=5 // pred_region
        %s244 = ssub.s32 %s16, 1
        %p245 = scmp.lt.s32.totalorder %s21, 1
        %s246 = scalar_select %p245, %s21, 1
        %s247 = smul.addr %s246, 4
        %s248 = scalar_lea.vmem %s0, %s247
        %p249 = pneg %p42
        %p250 = pneg %p39
        %p251 = pneg %p63
        %p252 = pneg %p60
        %p253 = pneg %p84
        %p254 = pneg %p81
        %p255 = pneg %p105
        %p256 = pneg %p102
        %p257 = pneg %p126
        %p258 = pneg %p123
        %p259 = pneg %p147
        %p260 = pneg %p144
        %p261 = pneg %p168
        %p262 = pneg %p165
        %p263 = pneg %p194
        %p264 = pneg %p191
        %s265 = sand.u32 %s181, 1
        %s266 = scalar_lea.sflag [#allocation3], %s265
        %s267 = sand.u32 %s181, 1
        %s268 = smul.addr %s267, 8
        %s269 = scalar_lea.vmem [#allocation2], %s268
        %p270 = scmp.lt.s32.totalorder %s21, 1
        %s271 = scalar_select %p270, %s21, 1
        %s272 = smul.addr %s271, 4
        %s273 = scalar_lea.vmem %s0, %s272
        %v274 = vld [vmem:[%s273] sm:$0xf]
        %v275 = vld [vmem:[%s1] sm:$0xff]
        %277 = vrot.lane.b32.xlu0 %v274, 1
        %v278 = vpop.permute.xlu0 %277
        %vm280 = vcmask 7168
        %v281 = vsel %vm280, 0.0, %v278
        %vm282 = vcmask 138240
        %v283 = vsel %vm282, %v281, 0.0
        %v285 = vrot.slane %v283, 4
        %286 = vrot.lane.b32.xlu0 %v285, 1
        %v287 = vpop.permute.xlu0 %286
        %289 = vrot.lane.b32.xlu0 %v283, 2
        %v290 = vpop.permute.xlu0 %289
        %vm291 = vcmask 1043456
        %v292 = vsel %vm291, %v283, %v287
        %v293 = vld [vmem:[%s2] sm:$0xff]
        %295 = vset.pattern.permute.xlu0 0
        %296 = vperm.xlu0 %295, %v293
        %v297 = vpop.permute.xlu0 %296
        %300 = vrot.lane.b32.xlu0 %v292, 126
        %v301 = vpop.permute.xlu0 %300
        %302 = vrot.lane.b32.xlu0 %v290, 126
        %v303 = vpop.permute.xlu0 %302
        %vm305 = vcmask 97280
        %v307 = vsel %vm305, %v275, 0
        %v309 = vsel %vm291, %v303, 0
        %311 = vmatprep.subr.mxu0 0.0
        %312 = vmatpush1.msra.mxu0 0.0
        %313 = vmatprep.subr.mxu0 0.0
        %314 = vmatpush1.msra.mxu0 0.0
        %315 = vmatprep.subr.mxu0 0.0
        %316 = vmatpush1.msra.mxu0 0.0
        %317 = vmatprep.subr.mxu0 0.0
        %318 = vmatpush1.msra.mxu0 0.0
        %319 = vmatprep.subr.mxu0 0.0
        %320 = vmatpush1.msra.mxu0 0.0
        %321 = vmatprep.subr.mxu0 0.0
        %322 = vmatpush1.msra.mxu0 0.0
        %323 = vmatprep.subr.mxu0 0.0
        %324 = vmatpush1.msra.mxu0 0.0
        %325 = vmatprep.subr.mxu0 0.0
        %326 = vmatpush1.msra.mxu0 0.0
        %327 = vmatprep.subr.mxu0 0.0
        %328 = vmatpush1.msra.mxu0 0.0
        %329 = vmatprep.subr.mxu0 0.0
        %330 = vmatpush1.msra.mxu0 0.0
        %331 = vmatprep.subr.mxu0 0.0
        %332 = vmatpush1.msra.mxu0 0.0
        %333 = vmatprep.subr.mxu0 0.0
        %334 = vmatpush1.msra.mxu0 0.0
        %335 = vmatprep.subr.mxu0 0.0
        %336 = vmatpush1.msra.mxu0 0.0
        %337 = vmatprep.subr.mxu0 0.0
        %338 = vmatpush1.msra.mxu0 0.0
        %339 = vmatprep.subr.mxu0 0.0
        %340 = vmatpush1.msra.mxu0 %v309
        %341 = vmatprep.subr.mxu0 0.0
        %342 = vmatpush1.msra.mxu0 %v301
        %343 = vmatprep.subr.mxu0 0.0
        %344 = vmatpush2.msra.mxu0 0.0
        %345 = vmatprep.subr.mxu0 0.0
        %346 = vmatpush2.msra.mxu0 0.0
        %347 = vmatprep.subr.mxu0 0.0
        %348 = vmatpush2.msra.mxu0 0.0
        %349 = vmatprep.subr.mxu0 0.0
        %350 = vmatpush2.msra.mxu0 0.0
        %351 = vmatprep.subr.mxu0 0.0
        %352 = vmatpush2.msra.mxu0 0.0
        %353 = vmatprep.subr.mxu0 0.0
        %354 = vmatpush2.msra.mxu0 0.0
        %355 = vmatprep.subr.mxu0 0.0
        %356 = vmatpush2.msra.mxu0 0.0
        %357 = vmatprep.subr.mxu0 0.0
        %358 = vmatpush2.msra.mxu0 0.0
        %359 = vmatprep.subr.mxu0 0.0
        %360 = vmatpush2.msra.mxu0 0.0
        %361 = vmatprep.subr.mxu0 0.0
        %362 = vmatpush2.msra.mxu0 0.0
        %363 = vmatprep.subr.mxu0 0.0
        %364 = vmatpush2.msra.mxu0 0.0
        %365 = vmatprep.subr.mxu0 0.0
        %366 = vmatpush2.msra.mxu0 0.0
        %367 = vmatprep.subr.mxu0 0.0
        %368 = vmatpush2.msra.mxu0 0.0
        %369 = vmatprep.subr.mxu0 0.0
        %370 = vmatpush2.msra.mxu0 0.0
        %371 = vmatprep.subr.mxu0 0.0
        %372 = vmatpush2.msra.mxu0 0.0
        %373 = vmatprep.subr.mxu0 0.0
        %374 = vmatpush2.msra.mxu0 0.0
        %375 = vmatprep.mubr.f32.mxu0 0.0
        %376 = vmatmul.mubr.f32.gmra.mxu0 %v307
        %v377 = vpop.f32.mrf.mxu0
        %v378 = vadd.f32 %v297, %v377
        %v379 = vpop.f32.mrf.mxu0
        %380 = vdwg.mxu0
        %vm381 = vcmask 130048
        %v382 = vsel %vm381, %v378, 0.0
        %383 = vadd.xlane.f32.xlu0 %v382
        %v384 = vpop.xlane.xlu0 %383
        %v385 = vmul.f32 %v384, 0.0625
        %v386 = vsub.f32 %v378, %v385
        %v387 = vmul.f32 %v386, %v386
        %v388 = vsel %vm381, %v387, 0.0
        %389 = vadd.xlane.f32.xlu0 %v388
        %v390 = vpop.xlane.xlu0 %389
        %v391 = vmul.f32 %v390, 0.0625
        %v392 = vadd.f32 %v391, 1e-05
        %v393 = vrsqrt.pop %v392
        %v394 = vmul.f32 %v386, %v393
        %v395 = vmax.f32 %v394, 0.0
        %v396 = vld [vmem:[%s3] sm:$0xff]
        %398 = vrot.lane.b32.xlu0 %v395, 1
        %v399 = vpop.permute.xlu0 %398
        %v401 = vsel %vm280, 0.0, %v399
        %v402 = vsel %vm282, %v401, 0.0
        %404 = vrot.lane.b32.xlu0 %v402, 1
        %v405 = vpop.permute.xlu0 %404
        %406 = vrot.lane.b32.xlu0 %v402, 2
        %v407 = vpop.permute.xlu0 %406
        %v408 = vld [vmem:[%s4] sm:$0xff]
        %410 = vset.pattern.permute.xlu0 0
        %411 = vperm.xlu0 %410, %v408
        %v412 = vpop.permute.xlu0 %411
        %414 = vrot.lane.b32.xlu0 %v402, 126
        %v415 = vpop.permute.xlu0 %414
        %416 = vrot.lane.b32.xlu0 %v405, 126
        %v417 = vpop.permute.xlu0 %416
        %418 = vrot.lane.b32.xlu0 %v407, 126
        %v419 = vpop.permute.xlu0 %418
        %vm423 = vcmask 195584
        %v425 = vsel %vm423, %v396, 0
        %427 = vmatprep.subr.mxu0 0.0
        %428 = vmatpush1.msra.mxu0 0.0
        %429 = vmatprep.subr.mxu0 0.0
        %430 = vmatpush1.msra.mxu0 0.0
        %431 = vmatprep.subr.mxu0 0.0
        %432 = vmatpush1.msra.mxu0 0.0
        %433 = vmatprep.subr.mxu0 0.0
        %434 = vmatpush1.msra.mxu0 0.0
        %435 = vmatprep.subr.mxu0 0.0
        %436 = vmatpush1.msra.mxu0 0.0
        %437 = vmatprep.subr.mxu0 0.0
        %438 = vmatpush1.msra.mxu0 0.0
        %439 = vmatprep.subr.mxu0 0.0
        %440 = vmatpush1.msra.mxu0 0.0
        %441 = vmatprep.subr.mxu0 0.0
        %442 = vmatpush1.msra.mxu0 0.0
        %443 = vmatprep.subr.mxu0 0.0
        %444 = vmatpush1.msra.mxu0 0.0
        %445 = vmatprep.subr.mxu0 0.0
        %446 = vmatpush1.msra.mxu0 0.0
        %447 = vmatprep.subr.mxu0 0.0
        %448 = vmatpush1.msra.mxu0 0.0
        %449 = vmatprep.subr.mxu0 0.0
        %450 = vmatpush1.msra.mxu0 0.0
        %451 = vmatprep.subr.mxu0 0.0
        %452 = vmatpush1.msra.mxu0 0.0
        %453 = vmatprep.subr.mxu0 0.0
        %454 = vmatpush1.msra.mxu0 %v419
        %455 = vmatprep.subr.mxu0 0.0
        %456 = vmatpush1.msra.mxu0 %v417
        %457 = vmatprep.subr.mxu0 0.0
        %458 = vmatpush1.msra.mxu0 %v415
        %459 = vmatprep.subr.mxu0 0.0
        %460 = vmatpush2.msra.mxu0 0.0
        %461 = vmatprep.subr.mxu0 0.0
        %462 = vmatpush2.msra.mxu0 0.0
        %463 = vmatprep.subr.mxu0 0.0
        %464 = vmatpush2.msra.mxu0 0.0
        %465 = vmatprep.subr.mxu0 0.0
        %466 = vmatpush2.msra.mxu0 0.0
        %467 = vmatprep.subr.mxu0 0.0
        %468 = vmatpush2.msra.mxu0 0.0
        %469 = vmatprep.subr.mxu0 0.0
        %470 = vmatpush2.msra.mxu0 0.0
        %471 = vmatprep.subr.mxu0 0.0
        %472 = vmatpush2.msra.mxu0 0.0
        %473 = vmatprep.subr.mxu0 0.0
        %474 = vmatpush2.msra.mxu0 0.0
        %475 = vmatprep.subr.mxu0 0.0
        %476 = vmatpush2.msra.mxu0 0.0
        %477 = vmatprep.subr.mxu0 0.0
        %478 = vmatpush2.msra.mxu0 0.0
        %479 = vmatprep.subr.mxu0 0.0
        %480 = vmatpush2.msra.mxu0 0.0
        %481 = vmatprep.subr.mxu0 0.0
        %482 = vmatpush2.msra.mxu0 0.0
        %483 = vmatprep.subr.mxu0 0.0
        %484 = vmatpush2.msra.mxu0 0.0
        %485 = vmatprep.subr.mxu0 0.0
        %486 = vmatpush2.msra.mxu0 0.0
        %487 = vmatprep.subr.mxu0 0.0
        %488 = vmatpush2.msra.mxu0 0.0
        %489 = vmatprep.subr.mxu0 0.0
        %490 = vmatpush2.msra.mxu0 0.0
        %491 = vmatprep.mubr.f32.mxu0 0.0
        %492 = vmatmul.mubr.f32.gmra.mxu0 %v425
        %v493 = vpop.f32.mrf.mxu0
        %v494 = vadd.f32 %v412, %v493
        %v495 = vpop.f32.mrf.mxu0
        %496 = vdwg.mxu0
        %v497 = vld [vmem:[%s5] sm:$0xff]
        %v498 = vld [vmem:[%s6] sm:$0xff]
        %500 = vset.pattern.permute.xlu0 0
        %501 = vperm.xlu0 %500, %v498
        %v502 = vpop.permute.xlu0 %501
        %vm504 = vcmask 31744
        %v506 = vsel %vm504, %v497, 0
        %v508 = vsel %vm291, %v274, 0
        %510 = vmatprep.subr.mxu0 0.0
        %511 = vmatpush1.msra.mxu0 0.0
        %512 = vmatprep.subr.mxu0 0.0
        %513 = vmatpush1.msra.mxu0 0.0
        %514 = vmatprep.subr.mxu0 0.0
        %515 = vmatpush1.msra.mxu0 0.0
        %516 = vmatprep.subr.mxu0 0.0
        %517 = vmatpush1.msra.mxu0 0.0
        %518 = vmatprep.subr.mxu0 0.0
        %519 = vmatpush1.msra.mxu0 0.0
        %520 = vmatprep.subr.mxu0 0.0
        %521 = vmatpush1.msra.mxu0 0.0
        %522 = vmatprep.subr.mxu0 0.0
        %523 = vmatpush1.msra.mxu0 0.0
        %524 = vmatprep.subr.mxu0 0.0
        %525 = vmatpush1.msra.mxu0 0.0
        %526 = vmatprep.subr.mxu0 0.0
        %527 = vmatpush1.msra.mxu0 0.0
        %528 = vmatprep.subr.mxu0 0.0
        %529 = vmatpush1.msra.mxu0 0.0
        %530 = vmatprep.subr.mxu0 0.0
        %531 = vmatpush1.msra.mxu0 0.0
        %532 = vmatprep.subr.mxu0 0.0
        %533 = vmatpush1.msra.mxu0 0.0
        %534 = vmatprep.subr.mxu0 0.0
        %535 = vmatpush1.msra.mxu0 0.0
        %536 = vmatprep.subr.mxu0 0.0
        %537 = vmatpush1.msra.mxu0 0.0
        %538 = vmatprep.subr.mxu0 0.0
        %539 = vmatpush1.msra.mxu0 0.0
        %540 = vmatprep.subr.mxu0 0.0
        %541 = vmatpush1.msra.mxu0 %v508
        %542 = vmatprep.subr.mxu0 0.0
        %543 = vmatpush2.msra.mxu0 0.0
        %544 = vmatprep.subr.mxu0 0.0
        %545 = vmatpush2.msra.mxu0 0.0
        %546 = vmatprep.subr.mxu0 0.0
        %547 = vmatpush2.msra.mxu0 0.0
        %548 = vmatprep.subr.mxu0 0.0
        %549 = vmatpush2.msra.mxu0 0.0
        %550 = vmatprep.subr.mxu0 0.0
        %551 = vmatpush2.msra.mxu0 0.0
        %552 = vmatprep.subr.mxu0 0.0
        %553 = vmatpush2.msra.mxu0 0.0
        %554 = vmatprep.subr.mxu0 0.0
        %555 = vmatpush2.msra.mxu0 0.0
        %556 = vmatprep.subr.mxu0 0.0
        %557 = vmatpush2.msra.mxu0 0.0
        %558 = vmatprep.subr.mxu0 0.0
        %559 = vmatpush2.msra.mxu0 0.0
        %560 = vmatprep.subr.mxu0 0.0
        %561 = vmatpush2.msra.mxu0 0.0
        %562 = vmatprep.subr.mxu0 0.0
        %563 = vmatpush2.msra.mxu0 0.0
        %564 = vmatprep.subr.mxu0 0.0
        %565 = vmatpush2.msra.mxu0 0.0
        %566 = vmatprep.subr.mxu0 0.0
        %567 = vmatpush2.msra.mxu0 0.0
        %568 = vmatprep.subr.mxu0 0.0
        %569 = vmatpush2.msra.mxu0 0.0
        %570 = vmatprep.subr.mxu0 0.0
        %571 = vmatpush2.msra.mxu0 0.0
        %572 = vmatprep.subr.mxu0 0.0
        %573 = vmatpush2.msra.mxu0 0.0
        %574 = vmatprep.mubr.f32.mxu0 0.0
        %575 = vmatmul.mubr.f32.gmra.mxu0 %v506
        %v576 = vpop.f32.mrf.mxu0
        %v577 = vadd.f32 %v502, %v576
        %v578 = vpop.f32.mrf.mxu0
        %579 = vdwg.mxu0
        %v580 = vadd.f32 %v494, %v577
        %v581 = vsel %vm381, %v580, 0.0
        %582 = vadd.xlane.f32.xlu0 %v581
        %v583 = vpop.xlane.xlu0 %582
        %v584 = vmul.f32 %v583, 0.0625
        %v585 = vsub.f32 %v580, %v584
        %v586 = vmul.f32 %v585, %v585
        %v587 = vsel %vm381, %v586, 0.0
        %588 = vadd.xlane.f32.xlu0 %v587
        %v589 = vpop.xlane.xlu0 %588
        %v590 = vmul.f32 %v589, 0.0625
        %v591 = vadd.f32 %v590, 1e-05
        %v592 = vrsqrt.pop %v591
        %v593 = vmul.f32 %v585, %v592
        %v594 = vmax.f32 %v593, 0.0
        %595 = vst.msk [vmem:[%s269] sm:$0xff] %vm381, %v594
        %s596 = sand.u32 %s181, 1
        %s597 = scalar_lea.sflag [#allocation3], %s596
        %s598 = sand.u32 %s181, 1
        %s599 = smul.addr %s598, 8
        %s600 = scalar_lea.vmem [#allocation2], %s599
        // Predicated region
        $region49: #{tpu_custom_call.1} parent=47 // pred_check
          %p601 = pneg %p191
        $region50: #{tpu_custom_call.1} parent=47 // pred_check_branch
          %603 = sbr.rel (%p601) target = $region52
        $region51: #{tpu_custom_call.1} parent=47 // pred_region
          %s605 = ssub.s32 128, 128
          %606 = vsyncadd %s597, %s605
          %s607 = smul.addr %s21, 128
          %s608 = scalar_lea.hbm %s7, %s607
          %s610 = sshll.u32 %s600, 4
          %s611 = int_to_ptr.vmem [resolvable:$true] %s610
          %613 = dma.vmem_to_hbm [thread:$0]  %s611, 128, %s608, %s597
        $region52: #{tpu_custom_call.1} parent=47 // pred_fallthru
          _
      $region48: #{tpu_custom_call.1} parent=5 // pred_fallthru
        _
      %p614 = scmp.le.s32.totalorder 2, %s16
      // Predicated region
      $region53: #{tpu_custom_call.1} parent=5 // pred_check
        %p615 = pneg %p614
      $region54: #{tpu_custom_call.1} parent=5 // pred_check_branch
        %617 = sbr.rel (%p615) target = $region56
      $region55: #{tpu_custom_call.1} parent=5 // pred_region
        %s618 = ssub.s32 %s16, 2
        // Predicated region
        $region57: #{tpu_custom_call.1} parent=55 // pred_check
          %p619 = pneg %p197
        $region58: #{tpu_custom_call.1} parent=55 // pred_check_branch
          %621 = sbr.rel (%p619) target = $region60
        $region59: #{tpu_custom_call.1} parent=55 // pred_region
          %s622 = sand.u32 %s182, 1
          %s623 = scalar_lea.sflag [#allocation3], %s622
          %s624 = sand.u32 %s182, 1
          %s625 = smul.addr %s624, 8
          %s626 = scalar_lea.vmem [#allocation2], %s625
          %627 = dma.done %s623, 128
        $region60: #{tpu_custom_call.1} parent=55 // pred_fallthru
          _
      $region56: #{tpu_custom_call.1} parent=5 // pred_fallthru
        _
    $region6: #{tpu_custom_call.1} parent=1 // loop_footer
      %s20 = sadd.s32 1, %s16
    $region7: #{tpu_custom_call.1} parent=1 // loop_footer_branch
      %15 = sbr.rel target = $region3
    $region8: #{tpu_custom_call.1} parent=1 // loop_exit
      _
    %628 = vsyncpa [#allocation3], 1
    %s629 = scalar_lea.sflag [#allocation3], 1
    %630 = vsyncpa %s629, 1

</llo_original>
